<compile_context>
chip_gen: v7x
topology: tpu7x:2x2x1
jax: 0.10.0
libtpu: 0.0.40
codegen_flags: <defaults>
</compile_context>

<pallas_src>
import functools

import jax
import jax.numpy as jnp
from jax.experimental import pallas as pl
from jax.experimental.pallas import tpu as pltpu

LANE = 128
SUBLANE = 8


def _cdiv(a, b):
    return -(-a // b)


def _loss_ref(inputs, targets):
    """Fused pure-JAX path (also the numerical reference)."""
    z = jax.nn.log_softmax(inputs.astype(jnp.float32), axis=1)
    t = targets.astype(jnp.float32)
    loss = jnp.maximum(z, 0.0) - z * t + jnp.log1p(jnp.exp(-jnp.abs(z)))
    return jnp.mean(loss)


def _vmem_capacity_bytes():
    try:
        v = int(pltpu.get_tpu_info().vmem_capacity_bytes)
        if v > 0:
            return v
    except Exception:
        pass
    return 128 * 1024 * 1024  # v5e/v6e default


def _num_tensorcores():
    """Best-effort TensorCore-per-device count (1 on v5e/v6e, 2 on v7x)."""
    try:
        info = pltpu.get_tpu_info()
        for name in ("num_cores", "core_count", "num_tensorcores",
                     "num_tensor_cores", "tensor_core_count"):
            v = getattr(info, name, None)
            if v is None:
                continue
            try:
                v = int(v)
            except (TypeError, ValueError):
                continue
            if 1 <= v <= 16:
                return v
    except Exception:
        pass
    try:
        kind = jax.devices()[0].device_kind.lower()
        if "v7" in kind:
            return 2
    except Exception:
        pass
    return 1


def _bce_kernel(x_ref, t_ref, o_ref, *, rt, hw, num_blocks, blocks_per_prog,
                p_split, mask_needed):
    j = pl.program_id(1)

    @pl.when(j == 0)
    def _init():
        o_ref[...] = jnp.zeros_like(o_ref)

    x = x_ref[0].astype(jnp.float32)   # (C, rt, LANE)
    t = t_ref[0].astype(jnp.float32)   # (C, rt, LANE)

    # log-softmax over the channel axis (axis 0).  C is a leading (non-layout)
    # axis, so these reductions are plain VALU loops over packed (rt, LANE)
    # vregs -- no sublane padding and no XLU cross-lane work.
    xm = x - jnp.max(x, axis=0, keepdims=True)        # (C, rt, LANE)
    e = jnp.exp(xm)                                   # single exp per element
    s = jnp.sum(e, axis=0, keepdims=True)             # (1, rt, LANE)
    z = xm - jnp.log(s)                               # log_softmax, z <= 0
    prob = e * pl.reciprocal(s, approx=False)         # softmax == exp(z)

    # BCE-with-logits on z:  max(z,0)=0, |z|=-z  =>  loss = -z*t + log1p(exp(z))
    loss = jnp.log1p(prob) - z * t                    # (C, rt, LANE)
    lsum = jnp.sum(loss, axis=0)                      # (rt, LANE)

    if not mask_needed:
        o_ref[...] += jnp.sum(lsum, axis=0)[None, None, :]
    else:
        i = pl.program_id(0)
        p = (i % p_split) if p_split > 1 else 0
        blk = p * blocks_per_prog + j
        last = num_blocks - 1

        @pl.when(blk < last)
        def _full_block():
            o_ref[...] += jnp.sum(lsum, axis=0)[None, None, :]

        # Only the boundary (or index-clamped overflow) block pays for the
        # iota/compare/select mask; garbage rows of the partial block are
        # zeroed before the row reduction.
        @pl.when(blk >= last)
        def _boundary_block():
            row = jax.lax.broadcasted_iota(jnp.int32, (rt, LANE), 0)
            lane = jax.lax.broadcasted_iota(jnp.int32, (rt, LANE), 1)
            pos = (blk * rt + row) * LANE + lane
            sel = jnp.where(pos < hw, lsum, 0.0)
            o_ref[...] += jnp.sum(sel, axis=0)[None, None, :]


def bce_loss_2d_2(inputs, targets, *, block_bytes=None):
    """inputs, targets: (N, C, H, W) float arrays. Returns scalar f32 loss."""
    if inputs.ndim != 4:
        raise ValueError("BCELoss2d_2 expects NCHW inputs")
    N, C, H, W = inputs.shape
    HW = H * W
    n_elems = N * C * HW

    if HW % LANE != 0:
        # A lane-dense (R, 128) relayout would require padding, which costs a
        # full extra HBM round trip of both tensors; a single fused XLA pass
        # is cheaper for these shapes.
        # TODO(synk): add a C-on-sublane Pallas path for H*W % 128 != 0.
        return _loss_ref(inputs, targets)

    R = HW // LANE
    itemsize = max(jnp.dtype(inputs.dtype).itemsize,
                   jnp.dtype(targets.dtype).itemsize)

    # --- tile selection & VMEM budget ---------------------------------------
    vmem_cap = _vmem_capacity_bytes()
    if block_bytes is None:
        # Bigger blocks on 128 MiB-VMEM parts (v5e/v6e), smaller on v7x (64 MiB).
        block_bytes = (4 * 1024 * 1024 if vmem_cap >= 96 * 1024 * 1024
                       else 2 * 1024 * 1024)

    rt = max(SUBLANE, (block_bytes // (C * LANE * itemsize)) // SUBLANE * SUBLANE)
    if rt >= R:
        rt = R  # single block; equals the full dim so need not be a multiple of 8

    def budget(rows):
        b_in = C * rows * LANE * itemsize   # per-input block
        b_f32 = C * rows * LANE * 4         # f32 intermediates (e, z, loss, ...)
        return 4 * b_in + 6 * b_f32 + (1 << 20)

    fit_cap = min((vmem_cap * 3) // 4, 48 * 1024 * 1024)
    while rt > SUBLANE and budget(rt) > fit_cap:
        rt = max(SUBLANE, (rt // 2) // SUBLANE * SUBLANE)
    if budget(rt) > fit_cap:
        # Channel count too large for a single-tile channel softmax in VMEM.
        return _loss_ref(inputs, targets)

    num_blocks = _cdiv(R, rt)

    # --- parallel split across TensorCores ----------------------------------
    num_cores = _num_tensorcores()
    if num_cores > 1 and N < num_cores and num_blocks > 1:
        P = min(num_cores, num_blocks)          # spatial chunks per batch item
    else:
        P = 1                                   # single-TC parts: no rounding waste
    T = _cdiv(num_blocks, P)
    clamp_needed = (P * T != num_blocks)
    mask_needed = clamp_needed or (rt * num_blocks != R)
    NP = N * P

    # --- zero-copy layout: (N, C, H, W) -> (N, C, R, 128) --------------------
    x = inputs.reshape(N, C, R, LANE)
    t = targets.reshape(N, C, R, LANE)

    if P == 1:
        def in_index(i, j):
            return (i, 0, j, 0)
    else:
        def in_index(i, j):
            n = i // P
            blk = (i % P) * T + j
            if clamp_needed:
                # Overflow steps re-read the last valid block (their
                # contribution is masked to zero in the kernel).
                blk = jnp.minimum(blk, num_blocks - 1)
            return (n, 0, blk, 0)

    in_spec = pl.BlockSpec((1, C, rt, LANE), in_index)
    out_spec = pl.BlockSpec((1, 1, LANE), lambda i, j: (i, 0, 0))

    kernel = functools.partial(
        _bce_kernel, rt=rt, hw=HW, num_blocks=num_blocks,
        blocks_per_prog=T, p_split=P, mask_needed=mask_needed)

    vmem_limit = int(min(max(budget(rt), 32 * 1024 * 1024), fit_cap))

    def run(sems):
        return pl.pallas_call(
            kernel,
            out_shape=jax.ShapeDtypeStruct((NP, 1, LANE), jnp.float32),
            grid_spec=pltpu.PrefetchScalarGridSpec(
                num_scalar_prefetch=0,
                grid=(NP, T),
                in_specs=[in_spec, in_spec],
                out_specs=out_spec,
            ),
            compiler_params=pltpu.CompilerParams(
                dimension_semantics=sems,
                vmem_limit_bytes=vmem_limit,
            ),
        )(x, t)

    if num_cores > 1 and NP % num_cores == 0:
        sems = (pltpu.CORE_PARALLEL, pltpu.ARBITRARY)
    else:
        sems = (pltpu.PARALLEL, pltpu.ARBITRARY)

    if sems[0] is pltpu.CORE_PARALLEL:
        try:
            partials = run(sems)
        except Exception:
            # Conservative fallback if CORE_PARALLEL does not lower on this
            # part / grid (eager path only).
            partials = run((pltpu.PARALLEL, pltpu.ARBITRARY))
    else:
        partials = run(sems)

    return jnp.sum(partials) / jnp.float32(n_elems)


if __name__ == "__main__":
    key = jax.random.PRNGKey(0)
    k1, k2, k3, k4 = jax.random.split(key, 4)

    # Case 1: nominal small NCHW shape for the module.
    n, c, h, w = 2, 4, 16, 16
    x1 = jax.random.normal(k1, (n, c, h, w), dtype=jnp.float32)
    t1 = jax.random.uniform(k2, (n, c, h, w), dtype=jnp.float32)
    out1 = bce_loss_2d_2(x1, t1)
    jax.block_until_ready(out1)
    ref1 = _loss_ref(x1, t1)
    assert jnp.allclose(out1, ref1, rtol=1e-5, atol=1e-5), (out1, ref1)

    # Case 2: exercises N-in-grid, multi-block accumulation and the masked
    # ragged boundary block (R % rt != 0) with a small forced tile.
    n, c, h, w = 2, 3, 36, 128
    x2 = jax.random.normal(k3, (n, c, h, w), dtype=jnp.float32)
    t2 = jax.random.uniform(k4, (n, c, h, w), dtype=jnp.float32)
    out2 = bce_loss_2d_2(x2, t2, block_bytes=24 * 1024)
    jax.block_until_ready(out2)
    ref2 = _loss_ref(x2, t2)
    assert jnp.allclose(out2, ref2, rtol=1e-5, atol=1e-5), (out2, ref2)

    print("KERNEL_OK")
</pallas_src>

<mosaic_0001>
module attributes {stable_mosaic.version = 11 : i64} {
  func.func @_bce_kernel(%arg0: i32, %arg1: i32, %arg2: memref<1x4x2x128xf32, #tpu.memory_space<vmem>>, %arg3: memref<1x4x2x128xf32, #tpu.memory_space<vmem>>, %arg4: memref<1x1x128xf32, #tpu.memory_space<vmem>>) attributes {dimension_semantics = [#tpu.dimension_semantics<parallel>, #tpu.dimension_semantics<arbitrary>], iteration_bounds = array<i64: 2, 1>, scalar_prefetch = 0 : i64, scratch_operands = 0 : i64, tpu.core_type = #tpu.core_type<tc>, window_params = [{transform_indices = @transform_0, window_bounds = array<i64: 1, 4, 2, 128>}, {transform_indices = @transform_1, window_bounds = array<i64: 1, 4, 2, 128>}, {transform_indices = @transform_2, window_bounds = array<i64: 1, 1, 128>}]} {
    %c0_i32 = arith.constant 0 : i32
    %0 = arith.cmpi eq, %arg1, %c0_i32 : i32
    %1 = arith.extui %0 : i1 to i32
    %c0_i32_0 = arith.constant 0 : i32
    %2 = arith.cmpi ne, %1, %c0_i32_0 : i32
    scf.if %2 {
      %cst_17 = arith.constant 0.000000e+00 : f32
      %29 = vector.broadcast %cst_17 : f32 to vector<1x1x128xf32>
      %c0_18 = arith.constant 0 : index
      %c0_19 = arith.constant 0 : index
      %c0_20 = arith.constant 0 : index
      %30 = vector.load %arg4[%c0_18, %c0_19, %c0_20] : memref<1x1x128xf32, #tpu.memory_space<vmem>>, vector<1x1x128xf32>
      tpu.vector_store %arg4[%c0_18, %c0_19, %c0_20], %29 {strides = array<i32>} : memref<1x1x128xf32, #tpu.memory_space<vmem>>, vector<1x1x128xf32>,
    } else {
    }
    %c0 = arith.constant 0 : index
    %c0_1 = arith.constant 0 : index
    %c0_2 = arith.constant 0 : index
    %c0_3 = arith.constant 0 : index
    %3 = vector.load %arg2[%c0, %c0_1, %c0_2, %c0_3] : memref<1x4x2x128xf32, #tpu.memory_space<vmem>>, vector<1x4x2x128xf32>
    %4 = vector.shape_cast %3 : vector<1x4x2x128xf32> to vector<4x2x128xf32>
    %c0_4 = arith.constant 0 : index
    %c0_5 = arith.constant 0 : index
    %c0_6 = arith.constant 0 : index
    %c0_7 = arith.constant 0 : index
    %5 = vector.load %arg3[%c0_4, %c0_5, %c0_6, %c0_7] : memref<1x4x2x128xf32, #tpu.memory_space<vmem>>, vector<1x4x2x128xf32>
    %6 = vector.shape_cast %5 : vector<1x4x2x128xf32> to vector<4x2x128xf32>
    %cst = arith.constant dense<0xFF800000> : vector<2x128xf32>
    %7 = vector.multi_reduction <maximumf>, %4, %cst [0] : vector<4x2x128xf32> to vector<2x128xf32>
    %8 = vector.shape_cast %7 : vector<2x128xf32> to vector<1x2x128xf32>
    %9 = vector.broadcast %8 : vector<1x2x128xf32> to vector<4x2x128xf32>
    %10 = arith.subf %4, %9 : vector<4x2x128xf32>
    %11 = math.exp %10 : vector<4x2x128xf32>
    %cst_8 = arith.constant dense<0.000000e+00> : vector<2x128xf32>
    %12 = vector.multi_reduction <add>, %11, %cst_8 [0] : vector<4x2x128xf32> to vector<2x128xf32>
    %13 = vector.shape_cast %12 : vector<2x128xf32> to vector<1x2x128xf32>
    %14 = math.log %13 : vector<1x2x128xf32>
    %15 = vector.broadcast %14 : vector<1x2x128xf32> to vector<4x2x128xf32>
    %16 = arith.subf %10, %15 : vector<4x2x128xf32>
    %17 = tpu.reciprocal %13 : vector<1x2x128xf32> -> vector<1x2x128xf32>
    %18 = vector.broadcast %17 : vector<1x2x128xf32> to vector<4x2x128xf32>
    %19 = arith.mulf %11, %18 : vector<4x2x128xf32>
    %20 = math.log1p %19 : vector<4x2x128xf32>
    %21 = arith.mulf %16, %6 : vector<4x2x128xf32>
    %22 = arith.subf %20, %21 : vector<4x2x128xf32>
    %cst_9 = arith.constant dense<0.000000e+00> : vector<2x128xf32>
    %23 = vector.multi_reduction <add>, %22, %cst_9 [0] : vector<4x2x128xf32> to vector<2x128xf32>
    %c0_10 = arith.constant 0 : index
    %c0_11 = arith.constant 0 : index
    %c0_12 = arith.constant 0 : index
    %24 = vector.load %arg4[%c0_10, %c0_11, %c0_12] : memref<1x1x128xf32, #tpu.memory_space<vmem>>, vector<1x1x128xf32>
    %cst_13 = arith.constant dense<0.000000e+00> : vector<128xf32>
    %25 = vector.multi_reduction <add>, %23, %cst_13 [0] : vector<2x128xf32> to vector<128xf32>
    %26 = vector.shape_cast %25 : vector<128xf32> to vector<1x1x128xf32>
    %27 = arith.addf %24, %26 : vector<1x1x128xf32>
    %c0_14 = arith.constant 0 : index
    %c0_15 = arith.constant 0 : index
    %c0_16 = arith.constant 0 : index
    %28 = vector.load %arg4[%c0_14, %c0_15, %c0_16] : memref<1x1x128xf32, #tpu.memory_space<vmem>>, vector<1x1x128xf32>
    tpu.vector_store %arg4[%c0_14, %c0_15, %c0_16], %27 {strides = array<i32>} : memref<1x1x128xf32, #tpu.memory_space<vmem>>, vector<1x1x128xf32>,
    return
  }
  func.func @transform_0(%arg0: i32, %arg1: i32) -> (i32, i32, i32, i32) {
    %c0_i32 = arith.constant 0 : i32
    %c0_i32_0 = arith.constant 0 : i32
    %c0_i32_1 = arith.constant 0 : i32
    return %arg0, %c0_i32, %arg1, %c0_i32_0 : i32, i32, i32, i32
  }
  func.func @transform_1(%arg0: i32, %arg1: i32) -> (i32, i32, i32, i32) {
    %c0_i32 = arith.constant 0 : i32
    %c0_i32_0 = arith.constant 0 : i32
    %c0_i32_1 = arith.constant 0 : i32
    return %arg0, %c0_i32, %arg1, %c0_i32_0 : i32, i32, i32, i32
  }
  func.func @transform_2(%arg0: i32, %arg1: i32) -> (i32, i32, i32) {
    %c0_i32 = arith.constant 0 : i32
    %c0_i32_0 = arith.constant 0 : i32
    %c0_i32_1 = arith.constant 0 : i32
    return %arg0, %c0_i32, %c0_i32_0 : i32, i32, i32
  }
}

</mosaic_0001>

<llo_original>
// kernel: tpu_custom_call.1
$region0: #{tpu_custom_call.1}
  #allocation0 [shape = 'u32[]', space=smem, size = 0x4, offset = 0x4, fixed_abs, tag = 'smem constant byte address 0x4 - core index']
  #allocation1 [shape = 'u32[144,128]{1,0:T(1,128)}', space=vmem, size = 0x12000, scoped, tag = 'internal scratch']
  %s0 = inlined_call_operand.hbm [shape: f32[2,4,2,128], index: 0, kind: input, shape index: {}]
  %s1 = inlined_call_operand.hbm [shape: f32[2,4,2,128], index: 1, kind: input, shape index: {}]
  %s2 = inlined_call_operand.hbm [shape: f32[2,1,128], index: 2, kind: output, shape index: {}]
  %s3 = sld [smem:[#allocation0]]
  $region53: #{tpu_custom_call.1} parent=0
    _
  %s5 = ssub.s32 1, %s3
  %s6 = scalar_select 0, %s5, %s3
  $region1: #{tpu_custom_call.1} parent=0
    #allocation2 [shape = 'u8[8192]{0}', space=vmem, size = 0x2000, scoped, tag = 'input window, operand 0']
    #allocation3 [shape = 's32[2]{0}', space=sflag, size = 0x8, scoped, tag = 'scoped memory for tpu_custom_call.1']
    #allocation4 [shape = 's32[2]{0}', space=sflag, size = 0x8, scoped, tag = 'scoped memory for tpu_custom_call.1']
    #allocation5 [shape = 'u8[8192]{0}', space=vmem, size = 0x2000, scoped, tag = 'input window, operand 1']
    #allocation6 [shape = 's32[2]{0}', space=sflag, size = 0x8, scoped, tag = 'scoped memory for tpu_custom_call.1']
    #allocation7 [shape = 'u8[1024]{0}', space=vmem, size = 0x400, scoped, tag = 'output window, operand 0']
    %7 = vsyncpa [#allocation3], 0
    %s8 = scalar_lea.sflag [#allocation3], 1
    %9 = vsyncpa %s8, 0
    %10 = vsyncpa [#allocation6], 0
    %s11 = scalar_lea.sflag [#allocation6], 1
    %12 = vsyncpa %s11, 0
    %13 = vsyncpa [#allocation4], 0
    %s14 = scalar_lea.sflag [#allocation4], 1
    %15 = vsyncpa %s14, 0
    loop: start=0, step=1, limit=4
    $region2: #{tpu_custom_call.1} parent=1 // loop_pre_header
      _
    $region3: #{tpu_custom_call.1} parent=1 // loop_header
      %s17 = sphi 0, %s21
      %p18 = scmp.ge.s32.totalorder %s17, 4
      %s24 = sphi 0, %s36
      %s25 = sphi 0, %s32
      %s26 = sphi 0, %s24
      %s27 = sphi 0, %s25
      %s28 = sphi 0, %s26
      %s29 = sphi 0, %s27
      %s41 = sphi 0, %s43
      %s44 = sphi 0, %s41
      %s45 = sphi 0, %s44
      %s61 = sphi 0, %s45
      %s69 = sphi 0, %s71
      %s72 = sphi 0, %s69
      %s73 = sphi 0, %s72
      %s89 = sphi 0, %s73
      %s95 = sphi 0, %s97
      %s98 = sphi 0, %s95
      %s99 = sphi 0, %s98
      %s115 = sphi 0, %s99
    $region4: #{tpu_custom_call.1} parent=1 // loop_header_branch
      %20 = sbr.rel (%p18) target = $region8
    $region5: #{tpu_custom_call.1} parent=1 // loop_body
      %s22 = ssub.s32 %s17, 1
      %s23 = ssub.s32 %s17, 2
      %s30 = sadd.s32 1, %s25
      %p31 = scmp.ge.s32.totalorder %s30, 1
      %s32 = scalar_select %p31, 0, %s30
      %s33 = sadd.s32 1, %s24
      %s34 = scalar_select %p31, %s33, %s24
      %p35 = scmp.ge.s32.totalorder %s34, 2
      %s36 = scalar_select %p35, 0, %s34
      %s37 = ssub.s32 %s24, %s36
      %s38 = ssub.s32 %s25, %s32
      %s39 = sor.u32 %s37, %s38
      %p40 = scmp.eq.s32.totalorder %s39, 0
      %s42 = sadd.s32 %s41, 1
      %s43 = scalar_select %p40, %s41, %s42
      %p46 = pneg %p40
      %p47 = scmp.eq.s32.totalorder %s17, 1
      %p48 = por %p46, %p47
      %p49 = scmp.ne.s32.totalorder %s41, %s44
      %p50 = scmp.eq.s32.totalorder %s17, 0
      %p51 = por %p49, %p50
      %p52 = scmp.ne.s32.totalorder %s41, %s44
      %p53 = scmp.eq.s32.totalorder %s22, 1
      %p54 = por %p52, %p53
      %p55 = scmp.ne.s32.totalorder %s44, %s45
      %p56 = scmp.eq.s32.totalorder %s22, 0
      %p57 = por %p55, %p56
      %p58 = scmp.ne.s32.totalorder %s44, %s45
      %p59 = scmp.eq.s32.totalorder %s23, 1
      %p60 = por %p58, %p59
      %p62 = scmp.ne.s32.totalorder %s45, %s61
      %p63 = scmp.eq.s32.totalorder %s23, 0
      %p64 = por %p62, %p63
      %s65 = ssub.s32 %s24, %s36
      %s66 = ssub.s32 %s25, %s32
      %s67 = sor.u32 %s65, %s66
      %p68 = scmp.eq.s32.totalorder %s67, 0
      %s70 = sadd.s32 %s69, 1
      %s71 = scalar_select %p68, %s69, %s70
      %p74 = pneg %p68
      %p75 = scmp.eq.s32.totalorder %s17, 1
      %p76 = por %p74, %p75
      %p77 = scmp.ne.s32.totalorder %s69, %s72
      %p78 = scmp.eq.s32.totalorder %s17, 0
      %p79 = por %p77, %p78
      %p80 = scmp.ne.s32.totalorder %s69, %s72
      %p81 = scmp.eq.s32.totalorder %s22, 1
      %p82 = por %p80, %p81
      %p83 = scmp.ne.s32.totalorder %s72, %s73
      %p84 = scmp.eq.s32.totalorder %s22, 0
      %p85 = por %p83, %p84
      %p86 = scmp.ne.s32.totalorder %s72, %s73
      %p87 = scmp.eq.s32.totalorder %s23, 1
      %p88 = por %p86, %p87
      %p90 = scmp.ne.s32.totalorder %s73, %s89
      %p91 = scmp.eq.s32.totalorder %s23, 0
      %p92 = por %p90, %p91
      %s93 = ssub.s32 %s24, %s36
      %p94 = scmp.eq.s32.totalorder %s93, 0
      %s96 = sadd.s32 %s95, 1
      %s97 = scalar_select %p94, %s95, %s96
      %p100 = pneg %p94
      %p101 = scmp.eq.s32.totalorder %s17, 1
      %p102 = por %p100, %p101
      %p103 = scmp.ne.s32.totalorder %s95, %s98
      %p104 = scmp.eq.s32.totalorder %s17, 0
      %p105 = por %p103, %p104
      %p106 = scmp.ne.s32.totalorder %s95, %s98
      %p107 = scmp.eq.s32.totalorder %s22, 1
      %p108 = por %p106, %p107
      %p109 = scmp.ne.s32.totalorder %s98, %s99
      %p110 = scmp.eq.s32.totalorder %s22, 0
      %p111 = por %p109, %p110
      %p112 = scmp.ne.s32.totalorder %s98, %s99
      %p113 = scmp.eq.s32.totalorder %s23, 1
      %p114 = por %p112, %p113
      %p116 = scmp.ne.s32.totalorder %s99, %s115
      %p117 = scmp.eq.s32.totalorder %s23, 0
      %p118 = por %p116, %p117
      %p119 = scmp.le.s32.totalorder 1, %s17
      %p120 = scmp.lt.s32.totalorder %s17, 3
      %p121 = pnand %p119, %p120
      %p122 = pneg %p121
      // Predicated region
      $region9: #{tpu_custom_call.1} parent=5 // pred_check
        _
      $region10: #{tpu_custom_call.1} parent=5 // pred_check_branch
        %124 = sbr.rel (%p121) target = $region12
      $region11: #{tpu_custom_call.1} parent=5 // pred_region
        %s125 = ssub.s32 %s17, 1
      $region12: #{tpu_custom_call.1} parent=5 // pred_fallthru
        _
      %p126 = scmp.lt.s32.totalorder %s17, 2
      // Predicated region
      $region13: #{tpu_custom_call.1} parent=5 // pred_check
        %p127 = pneg %p126
      $region14: #{tpu_custom_call.1} parent=5 // pred_check_branch
        %129 = sbr.rel (%p127) target = $region16
      $region15: #{tpu_custom_call.1} parent=5 // pred_region
        // Predicated region
        $region17: #{tpu_custom_call.1} parent=15 // pred_check
          %p130 = pneg %p51
        $region18: #{tpu_custom_call.1} parent=15 // pred_check_branch
          %132 = sbr.rel (%p130) target = $region20
        $region19: #{tpu_custom_call.1} parent=15 // pred_region
          %s133 = sand.u32 %s41, 1
          %s134 = scalar_lea.sflag [#allocation3], %s133
          %s135 = sand.u32 %s41, 1
          %s136 = smul.addr %s135, 8
          %s137 = scalar_lea.vmem [#allocation2], %s136
          %s139 = ssub.s32 128, 128
          %140 = vsyncadd %s134, %s139
          %s141 = smul.addr %s24, 4
          %s142 = sadd.s32 %s25, %s141
          %s143 = smul.addr %s142, 32
          %s144 = scalar_lea.hbm %s0, %s143
          %s145 = sshll.u32 %s137, 4
          %s146 = int_to_ptr.vmem [resolvable:$true] %s145
          %151 = dma.hbm_to_vmem [thread:$0]  %s144, 128, %s146, %s134, 32, 32, 2
        $region20: #{tpu_custom_call.1} parent=15 // pred_fallthru
          _
        // Predicated region
        $region21: #{tpu_custom_call.1} parent=15 // pred_check
          %p152 = pneg %p79
        $region22: #{tpu_custom_call.1} parent=15 // pred_check_branch
          %154 = sbr.rel (%p152) target = $region24
        $region23: #{tpu_custom_call.1} parent=15 // pred_region
          %s155 = sand.u32 %s69, 1
          %s156 = scalar_lea.sflag [#allocation6], %s155
          %s157 = sand.u32 %s69, 1
          %s158 = smul.addr %s157, 8
          %s159 = scalar_lea.vmem [#allocation5], %s158
          %s161 = ssub.s32 128, 128
          %162 = vsyncadd %s156, %s161
          %s163 = smul.addr %s24, 4
          %s164 = sadd.s32 %s25, %s163
          %s165 = smul.addr %s164, 32
          %s166 = scalar_lea.hbm %s1, %s165
          %s167 = sshll.u32 %s159, 4
          %s168 = int_to_ptr.vmem [resolvable:$true] %s167
          %173 = dma.hbm_to_vmem [thread:$0]  %s166, 128, %s168, %s156, 32, 32, 2
        $region24: #{tpu_custom_call.1} parent=15 // pred_fallthru
          _
      $region16: #{tpu_custom_call.1} parent=5 // pred_fallthru
        _
      %p174 = scmp.le.s32.totalorder 1, %s17
      %p175 = scmp.lt.s32.totalorder %s17, 3
      %p176 = pnand %p174, %p175
      %p177 = pneg %p176
      // Predicated region
      $region25: #{tpu_custom_call.1} parent=5 // pred_check
        _
      $region26: #{tpu_custom_call.1} parent=5 // pred_check_branch
        %179 = sbr.rel (%p176) target = $region28
      $region27: #{tpu_custom_call.1} parent=5 // pred_region
        %s180 = ssub.s32 %s17, 1
        %s181 = sand.u32 %s44, 1
        %s182 = scalar_lea.sflag [#allocation3], %s181
        %s183 = sand.u32 %s44, 1
        %s184 = smul.addr %s183, 8
        %s185 = scalar_lea.vmem [#allocation2], %s184
        // Predicated region
        $region29: #{tpu_custom_call.1} parent=27 // pred_check
          %p186 = pneg %p57
        $region30: #{tpu_custom_call.1} parent=27 // pred_check_branch
          %188 = sbr.rel (%p186) target = $region32
        $region31: #{tpu_custom_call.1} parent=27 // pred_region
          %189 = dma.done %s182, 128
        $region32: #{tpu_custom_call.1} parent=27 // pred_fallthru
          _
        %s190 = sand.u32 %s72, 1
        %s191 = scalar_lea.sflag [#allocation6], %s190
        %s192 = sand.u32 %s72, 1
        %s193 = smul.addr %s192, 8
        %s194 = scalar_lea.vmem [#allocation5], %s193
        // Predicated region
        $region33: #{tpu_custom_call.1} parent=27 // pred_check
          %p195 = pneg %p85
        $region34: #{tpu_custom_call.1} parent=27 // pred_check_branch
          %197 = sbr.rel (%p195) target = $region36
        $region35: #{tpu_custom_call.1} parent=27 // pred_region
          %198 = dma.done %s191, 128
        $region36: #{tpu_custom_call.1} parent=27 // pred_fallthru
          _
        %s199 = sand.u32 %s44, 1
        %s200 = scalar_lea.sflag [#allocation3], %s199
        %s201 = sand.u32 %s44, 1
        %s202 = smul.addr %s201, 8
        %s203 = scalar_lea.vmem [#allocation2], %s202
        %p204 = pneg %p57
        %p205 = pneg %p54
        %s206 = sand.u32 %s72, 1
        %s207 = scalar_lea.sflag [#allocation6], %s206
        %s208 = sand.u32 %s72, 1
        %s209 = smul.addr %s208, 8
        %s210 = scalar_lea.vmem [#allocation5], %s209
        %p211 = pneg %p85
        %p212 = pneg %p82
        %p213 = pneg %p111
        %p214 = pneg %p108
        %s215 = sand.u32 %s98, 1
        %s216 = scalar_lea.sflag [#allocation4], %s215
        %s217 = sand.u32 %s98, 1
        %s218 = scalar_lea.vmem [#allocation7], %s217
        %p219 = scmp.eq.s32.totalorder %s27, 0
        // Predicated region
        $region37: #{tpu_custom_call.1} parent=27 // pred_check
          %p220 = pneg %p219
        $region38: #{tpu_custom_call.1} parent=27 // pred_check_branch
          %222 = sbr.rel (%p220) target = $region40
        $region39: #{tpu_custom_call.1} parent=27 // pred_region
          %223 = vst [vmem:[%s218] sm:$0x1] 0.0
        $region40: #{tpu_custom_call.1} parent=27 // pred_fallthru
          _
        %v224 = vld [vmem:[%s185] sm:$0x3]
        %v225 = vld [vmem:[%s185 + $0x2] sm:$0x3]
        %v226 = vld [vmem:[%s185 + $0x4] sm:$0x3]
        %v227 = vld [vmem:[%s185 + $0x6] sm:$0x3]
        %v228 = vld [vmem:[%s194] sm:$0x3]
        %v229 = vld [vmem:[%s194 + $0x2] sm:$0x3]
        %v230 = vld [vmem:[%s194 + $0x4] sm:$0x3]
        %v231 = vld [vmem:[%s194 + $0x6] sm:$0x3]
        %vm232 = vcmask 1041408
        %v233 = vsel %vm232, %v224, -inf
        %v234 = vsel %vm232, %v225, -inf
        %v235 = vsel %vm232, %v226, -inf
        %v236 = vsel %vm232, %v227, -inf
        %v237 = vmax.f32 %v233, %v234
        %v238 = vmax.f32 %v235, %v236
        %v239 = vmax.f32 %v237, %v238
        %v240 = vsub.f32 %v224, %v239
        %v241 = vsub.f32 %v225, %v239
        %v242 = vsub.f32 %v226, %v239
        %v243 = vsub.f32 %v227, %v239
        %v244 = vmul.f32 %v240, 1.442695
        %v245 = vpow.pop %v244
        %v246 = vmul.f32 %v241, 1.442695
        %v247 = vpow.pop %v246
        %v248 = vmul.f32 %v242, 1.442695
        %v249 = vpow.pop %v248
        %v250 = vmul.f32 %v243, 1.442695
        %v251 = vpow.pop %v250
        %v252 = vsel %vm232, %v245, 0.0
        %v253 = vsel %vm232, %v247, 0.0
        %v254 = vadd.f32 %v252, %v253
        %v255 = vsel %vm232, %v249, 0.0
        %v256 = vadd.f32 %v254, %v255
        %v257 = vsel %vm232, %v251, 0.0
        %v258 = vadd.f32 %v256, %v257
        %v259 = vlog2.pop %v258
        %v260 = vmul.f32 %v259, 0.6931472
        %v261 = vsub.f32 %v240, %v260
        %v262 = vsub.f32 %v241, %v260
        %v263 = vsub.f32 %v242, %v260
        %v264 = vsub.f32 %v243, %v260
        %v265 = vrcp.pop %v258
        %v266 = vmul.f32 %v245, %v265
        %v267 = vmul.f32 %v247, %v265
        %v268 = vmul.f32 %v249, %v265
        %v269 = vmul.f32 %v251, %v265
        %v270 = vadd.f32 %v266, 1.0
        %v271 = vlog2.pop %v270
        %v272 = vmul.f32 %v271, 0.6931472
        %v273 = vmul.f32 -0.5, %v266
        %v274 = vadd.f32 %v273, 1.0
        %v275 = vmul.f32 %v274, %v266
        %v276 = vand.u32 2147483647, %v266
        %vm277 = vcmp.lt.f32.partialorder %v276, 0.0004427343
        %v278 = vsel %vm277, %v275, %v272
        %v279 = vadd.f32 %v267, 1.0
        %v280 = vlog2.pop %v279
        %v281 = vmul.f32 %v280, 0.6931472
        %v282 = vmul.f32 -0.5, %v267
        %v283 = vadd.f32 %v282, 1.0
        %v284 = vmul.f32 %v283, %v267
        %v285 = vand.u32 2147483647, %v267
        %vm286 = vcmp.lt.f32.partialorder %v285, 0.0004427343
        %v287 = vsel %vm286, %v284, %v281
        %v288 = vadd.f32 %v268, 1.0
        %v289 = vlog2.pop %v288
        %v290 = vmul.f32 %v289, 0.6931472
        %v291 = vmul.f32 -0.5, %v268
        %v292 = vadd.f32 %v291, 1.0
        %v293 = vmul.f32 %v292, %v268
        %v294 = vand.u32 2147483647, %v268
        %vm295 = vcmp.lt.f32.partialorder %v294, 0.0004427343
        %v296 = vsel %vm295, %v293, %v290
        %v297 = vadd.f32 %v269, 1.0
        %v298 = vlog2.pop %v297
        %v299 = vmul.f32 %v298, 0.6931472
        %v300 = vmul.f32 -0.5, %v269
        %v301 = vadd.f32 %v300, 1.0
        %v302 = vmul.f32 %v301, %v269
        %v303 = vand.u32 2147483647, %v269
        %vm304 = vcmp.lt.f32.partialorder %v303, 0.0004427343
        %v305 = vsel %vm304, %v302, %v299
        %v306 = vmul.f32 %v261, %v228
        %v307 = vmul.f32 %v262, %v229
        %v308 = vmul.f32 %v263, %v230
        %v309 = vmul.f32 %v264, %v231
        %v310 = vsub.f32 %v278, %v306
        %v311 = vsub.f32 %v287, %v307
        %v312 = vsub.f32 %v296, %v308
        %v313 = vsub.f32 %v305, %v309
        %v314 = vsel %vm232, %v310, 0.0
        %v315 = vsel %vm232, %v311, 0.0
        %v316 = vadd.f32 %v314, %v315
        %v317 = vsel %vm232, %v312, 0.0
        %v318 = vadd.f32 %v316, %v317
        %v319 = vsel %vm232, %v313, 0.0
        %v320 = vadd.f32 %v318, %v319
        %v321 = vld [vmem:[%s218] sm:$0x1]
        %v322 = vsel %vm232, %v320, 0.0
        %v323 = vrot.slane %v322, 4
        %v324 = vadd.f32 %v322, %v323
        %v325 = vrot.slane %v324, 2
        %v326 = vadd.f32 %v324, %v325
        %v327 = vrot.slane %v326, 1
        %v328 = vadd.f32 %v326, %v327
        %v329 = vadd.f32 %v321, %v328
        %330 = vst [vmem:[%s218] sm:$0x1] %v329
        %s331 = sand.u32 %s98, 1
        %s332 = scalar_lea.sflag [#allocation4], %s331
        %s333 = sand.u32 %s98, 1
        %s334 = scalar_lea.vmem [#allocation7], %s333
        // Predicated region
        $region41: #{tpu_custom_call.1} parent=27 // pred_check
          %p335 = pneg %p108
        $region42: #{tpu_custom_call.1} parent=27 // pred_check_branch
          %337 = sbr.rel (%p335) target = $region44
        $region43: #{tpu_custom_call.1} parent=27 // pred_region
          %s339 = ssub.s32 16, 16
          %340 = vsyncadd %s332, %s339
          %s341 = smul.addr %s26, 16
          %s342 = scalar_lea.hbm %s2, %s341
          %s344 = sshll.u32 %s334, 4
          %s345 = int_to_ptr.vmem [resolvable:$true] %s344
          %347 = dma.vmem_to_hbm [thread:$0]  %s345, 16, %s342, %s332
        $region44: #{tpu_custom_call.1} parent=27 // pred_fallthru
          _
      $region28: #{tpu_custom_call.1} parent=5 // pred_fallthru
        _
      %p348 = scmp.le.s32.totalorder 2, %s17
      // Predicated region
      $region45: #{tpu_custom_call.1} parent=5 // pred_check
        %p349 = pneg %p348
      $region46: #{tpu_custom_call.1} parent=5 // pred_check_branch
        %351 = sbr.rel (%p349) target = $region48
      $region47: #{tpu_custom_call.1} parent=5 // pred_region
        %s352 = ssub.s32 %s17, 2
        // Predicated region
        $region49: #{tpu_custom_call.1} parent=47 // pred_check
          %p353 = pneg %p114
        $region50: #{tpu_custom_call.1} parent=47 // pred_check_branch
          %355 = sbr.rel (%p353) target = $region52
        $region51: #{tpu_custom_call.1} parent=47 // pred_region
          %s356 = sand.u32 %s99, 1
          %s357 = scalar_lea.sflag [#allocation4], %s356
          %s358 = sand.u32 %s99, 1
          %s359 = scalar_lea.vmem [#allocation7], %s358
          %360 = dma.done %s357, 16
        $region52: #{tpu_custom_call.1} parent=47 // pred_fallthru
          _
      $region48: #{tpu_custom_call.1} parent=5 // pred_fallthru
        _
    $region6: #{tpu_custom_call.1} parent=1 // loop_footer
      %s21 = sadd.s32 1, %s17
    $region7: #{tpu_custom_call.1} parent=1 // loop_footer_branch
      %16 = sbr.rel target = $region3
    $region8: #{tpu_custom_call.1} parent=1 // loop_exit
      _
    %361 = vsyncpa [#allocation3], 1
    %s362 = scalar_lea.sflag [#allocation3], 1
    %363 = vsyncpa %s362, 1
    %364 = vsyncpa [#allocation6], 1
    %s365 = scalar_lea.sflag [#allocation6], 1
    %366 = vsyncpa %s365, 1
    %367 = vsyncpa [#allocation4], 1
    %s368 = scalar_lea.sflag [#allocation4], 1
    %369 = vsyncpa %s368, 1

</llo_original>
